<compile_context>
chip_gen: v6e
topology: v6e:2x2x1
jax: 0.10.0
libtpu: 0.0.40
codegen_flags: <defaults>
</compile_context>

<pallas_src>
import math
from functools import partial

import jax
import jax.numpy as jnp
from jax.experimental import pallas as pl
from jax.experimental.pallas import tpu as pltpu


def _round_up(x, m):
    return ((x + m - 1) // m) * m


# ---------------------------------------------------------------------------
# Fused Pallas kernel: embed-lookup + pad + im2col + Conv1d matmul + bias
# ---------------------------------------------------------------------------

def _fused_time_conv_kernel(idx_ref, tab_ref, w_ref, b_ref, o_ref, lhs_ref,
                            *, K, DP, VP):
    # idx_ref : (tm, 2K) int32   per conv tap k: [hour_idx, n_hour + weekday_idx]
    # tab_ref : (VP, DP) bf16    combined (hour ++ weekday) embedding table
    # w_ref   : (K*DP, tn) bf16  conv weight, tap-major / channels-last
    # b_ref   : (1, tn)  f32     conv bias
    # o_ref   : (tm, tn) f32     output tile
    # lhs_ref : (tm, K*DP) bf16  scratch: im2col'd embeddings (reused across j)
    tm = o_ref.shape[0]
    j = pl.program_id(1)

    @pl.when(j == 0)
    def _build_patch_tile():
        # Embedding lookup + hour/weekday add + replication-pad + im2col,
        # realized as K small two-hot bf16 matmuls against the combined table.
        lanes = jax.lax.broadcasted_iota(jnp.int32, (tm, VP), 1)
        for k in range(K):                                    # K is small & static
            h_idx = idx_ref[:, 2 * k:2 * k + 1]               # (tm, 1)
            w_idx = idx_ref[:, 2 * k + 1:2 * k + 2]           # (tm, 1)
            two_hot = ((lanes == h_idx) | (lanes == w_idx)).astype(jnp.bfloat16)
            emb = jnp.dot(two_hot, tab_ref[...],
                          preferred_element_type=jnp.float32)  # lookup + add
            # k*DP is a multiple of 128 -> lane-tile-aligned static store.
            lhs_ref[:, k * DP:(k + 1) * DP] = emb.astype(lhs_ref.dtype)

    acc = jnp.dot(lhs_ref[...], w_ref[...], preferred_element_type=jnp.float32)
    o_ref[...] = (acc + b_ref[...]).astype(o_ref.dtype)


def fused_time_conv(idx, table, w_mat, bias_row, *, K, DP, VP, tm, tn):
    M_pad, two_k = idx.shape
    grid = (M_pad // tm, DP // tn)
    kernel = partial(_fused_time_conv_kernel, K=K, DP=DP, VP=VP)
    return pl.pallas_call(
        kernel,
        out_shape=jax.ShapeDtypeStruct((M_pad, DP), jnp.float32),
        grid_spec=pltpu.PrefetchScalarGridSpec(
            num_scalar_prefetch=0,
            grid=grid,
            in_specs=[
                pl.BlockSpec((tm, two_k), lambda i, j: (i, 0)),   # int32 tap indices
                pl.BlockSpec((VP, DP), lambda i, j: (0, 0)),      # combined table (bf16)
                pl.BlockSpec((K * DP, tn), lambda i, j: (0, j)),  # conv weight (bf16)
                pl.BlockSpec((1, tn), lambda i, j: (0, j)),       # bias (f32)
            ],
            out_specs=pl.BlockSpec((tm, tn), lambda i, j: (i, j)),
            scratch_shapes=[pltpu.VMEM((tm, K * DP), jnp.bfloat16)],
        ),
        compiler_params=pltpu.CompilerParams(
            dimension_semantics=("parallel", "arbitrary")),
    )(idx, table, w_mat, bias_row)


# ---------------------------------------------------------------------------
# Module (parameter init matches the PyTorch __init__)
# ---------------------------------------------------------------------------

class TimeEmbedding:
    def __init__(self, d_model, t_patch_len, stride, key, *, tile_m=256):
        self.d_model = d_model
        self.t_patch_len = t_patch_len
        self.stride = stride
        self.tile_m = tile_m

        keys = jax.random.split(key, 7)

        def xavier_uniform(k, num_emb, dim):
            bound = math.sqrt(6.0 / (num_emb + dim))
            return jax.random.uniform(k, (num_emb, dim), jnp.float32,
                                      minval=-bound, maxval=bound)

        self.weekday_embed = xavier_uniform(keys[0], 7, d_model)
        self.hour_embed_24 = xavier_uniform(keys[1], 24, d_model)
        self.hour_embed_48 = xavier_uniform(keys[2], 48, d_model)
        self.hour_embed_96 = xavier_uniform(keys[3], 96, d_model)
        self.hour_embed_288 = xavier_uniform(keys[4], 288, d_model)

        # Conv1d(d_model, d_model, K, stride): kaiming_normal_(fan_in, leaky_relu)
        fan_in = d_model * t_patch_len
        gain = math.sqrt(2.0 / (1.0 + 0.01 ** 2))
        std = gain / math.sqrt(fan_in)
        self.conv_weight = std * jax.random.normal(
            keys[5], (d_model, d_model, t_patch_len), jnp.float32)  # (out, in, K)
        bbound = 1.0 / math.sqrt(fan_in)
        self.conv_bias = jax.random.uniform(keys[6], (d_model,), jnp.float32,
                                            minval=-bbound, maxval=bbound)

    def _hour_table(self, hour_num):
        if '24' in hour_num:
            return self.hour_embed_24
        elif '48' in hour_num:
            return self.hour_embed_48
        elif '288' in hour_num:
            return self.hour_embed_288
        elif '96' in hour_num:
            return self.hour_embed_96
        raise ValueError(hour_num)

    def forward(self, x_mark, hour_num):
        # x_mark: int (B, L, >=2); [:,:,0]=weekday idx, [:,:,1]=hour idx
        B, L, _ = x_mark.shape
        D, K, S = self.d_model, self.t_patch_len, self.stride
        hour_tab = self._hour_table(hour_num)
        n_hour = hour_tab.shape[0]

        pad = K - S                       # ReplicationPad1d((0, K - S))
        n_out = (L + pad - K) // S + 1

        # ---- wrapper-side plumbing: im2col on INT32 INDICES only (clamp = pad) ----
        t_idx = jnp.clip(jnp.arange(n_out)[:, None] * S + jnp.arange(K)[None, :],
                         0, L - 1)                                 # (n_out, K)
        hour_g = jnp.take(x_mark[:, :, 1], t_idx, axis=1)          # (B, n_out, K)
        wd_g = jnp.take(x_mark[:, :, 0], t_idx, axis=1)
        comb = jnp.stack([hour_g, wd_g + n_hour], axis=-1)         # (B, n_out, K, 2)
        idx = comb.reshape(B * n_out, 2 * K).astype(jnp.int32)

        # ---- padded/tiled sizes: lane-dense (128) features, 8-aligned rows ----
        DP = _round_up(D, 128)
        V = n_hour + 7
        VP = _round_up(V, 128)
        M = B * n_out
        tm = min(self.tile_m, _round_up(M, 8))
        M_pad = _round_up(M, tm)
        tn = 512 if DP % 512 == 0 else (256 if DP % 256 == 0 else 128)
        if M_pad > M:
            idx = jnp.concatenate(
                [idx, jnp.zeros((M_pad - M, 2 * K), jnp.int32)], axis=0)

        # combined (hour ++ weekday) table, zero-padded; bf16 feed to the MXU
        # (the im2col scratch is bf16 anyway, so no end-to-end accuracy loss).
        table = jnp.zeros((VP, DP), jnp.float32)
        table = table.at[:n_hour, :D].set(hour_tab)
        table = table.at[n_hour:V, :D].set(self.weekday_embed)
        table = table.astype(jnp.bfloat16)

        # conv weight (out,in,K) -> channels-last tap-major (K*DP, DP), bf16 feed
        w_p = jnp.zeros((DP, DP, K), jnp.float32).at[:D, :D, :].set(self.conv_weight)
        w_mat = jnp.transpose(w_p, (2, 1, 0)).reshape(K * DP, DP).astype(jnp.bfloat16)
        bias_row = jnp.zeros((1, DP), jnp.float32).at[0, :D].set(self.conv_bias)

        out = fused_time_conv(idx, table, w_mat, bias_row,
                              K=K, DP=DP, VP=VP, tm=tm, tn=tn)     # (M_pad, DP)
        return out[:M, :D].reshape(B, n_out, D)


# ---------------------------------------------------------------------------
# Pure-JAX reference (for the smoke test)
# ---------------------------------------------------------------------------

def reference_forward(module, x_mark, hour_num):
    B, L, _ = x_mark.shape
    D, K, S = module.d_model, module.t_patch_len, module.stride
    tab = module._hour_table(hour_num)
    emb = tab[x_mark[:, :, 1]] + module.weekday_embed[x_mark[:, :, 0]]   # (B,L,D)
    pad = K - S
    if pad > 0:
        emb = jnp.concatenate([emb, jnp.repeat(emb[:, -1:, :], pad, axis=1)], axis=1)
    n_out = (L + pad - K) // S + 1
    t_idx = jnp.arange(n_out)[:, None] * S + jnp.arange(K)[None, :]
    patches = emb[:, t_idx, :]                                           # (B,N,K,D)
    return jnp.einsum('bnkc,ock->bno', patches, module.conv_weight) + module.conv_bias


# ---------------------------------------------------------------------------
# Demo / smoke test
# ---------------------------------------------------------------------------

if __name__ == "__main__":
    key = jax.random.PRNGKey(0)
    k_param, k_wd, k_hr = jax.random.split(key, 3)

    d_model = 32
    t_patch_len = 4
    stride = 2
    B, L = 2, 24
    hour_num = '24'

    module = TimeEmbedding(d_model, t_patch_len, stride, k_param)

    weekday = jax.random.randint(k_wd, (B, L), 0, 7, dtype=jnp.int32)
    hour = jax.random.randint(k_hr, (B, L), 0, 24, dtype=jnp.int32)
    x_mark = jnp.stack([weekday, hour], axis=-1)                          # (B, L, 2)

    out = jax.block_until_ready(module.forward(x_mark, hour_num))

    expected_n = (L + (t_patch_len - stride) - t_patch_len) // stride + 1
    assert out.shape == (B, expected_n, d_model), out.shape
    assert out.dtype == jnp.float32
    assert bool(jnp.all(jnp.isfinite(out)))

    ref = reference_forward(module, x_mark, hour_num)
    max_err = float(jnp.max(jnp.abs(out - ref)))
    assert max_err < 5e-2, max_err   # bf16-fed MXU, f32 accumulation

    print("KERNEL_OK")
</pallas_src>

<mosaic_0001>
module attributes {stable_mosaic.version = 11 : i64} {
  func.func @_fused_time_conv_kernel(%arg0: i32, %arg1: i32, %arg2: memref<24x8xi32, #tpu.memory_space<vmem>>, %arg3: memref<128x128xbf16, #tpu.memory_space<vmem>>, %arg4: memref<512x128xbf16, #tpu.memory_space<vmem>>, %arg5: memref<1x128xf32, #tpu.memory_space<vmem>>, %arg6: memref<24x128xf32, #tpu.memory_space<vmem>>, %arg7: memref<24x512xbf16, #tpu.memory_space<vmem>>) attributes {dimension_semantics = [#tpu.dimension_semantics<parallel>, #tpu.dimension_semantics<arbitrary>], iteration_bounds = array<i64: 1, 1>, scalar_prefetch = 0 : i64, scratch_operands = 1 : i64, tpu.core_type = #tpu.core_type<tc>, window_params = [{transform_indices = @transform_0, window_bounds = array<i64: 24, 8>}, {pipeline_mode = #tpu.pipeline_mode<synchronous>, transform_indices = @transform_1, window_bounds = array<i64: 128, 128>}, {transform_indices = @transform_2, window_bounds = array<i64: 512, 128>}, {transform_indices = @transform_3, window_bounds = array<i64: 1, 128>}, {transform_indices = @transform_4, window_bounds = array<i64: 24, 128>}]} {
    %c0_i32 = arith.constant 0 : i32
    %0 = arith.cmpi eq, %arg1, %c0_i32 : i32
    %1 = arith.extui %0 : i1 to i32
    %c0_i32_0 = arith.constant 0 : i32
    %2 = arith.cmpi ne, %1, %c0_i32_0 : i32
    scf.if %2 {
      %10 = tpu.iota {dimensions = array<i32: 1>} : vector<24x128xi32>
      %c0_8 = arith.constant 0 : index
      %c0_9 = arith.constant 0 : index
      %11 = vector.load %arg2[%c0_8, %c0_9] : memref<24x8xi32, #tpu.memory_space<vmem>>, vector<24x1xi32>
      %c0_10 = arith.constant 0 : index
      %c1 = arith.constant 1 : index
      %12 = vector.load %arg2[%c0_10, %c1] : memref<24x8xi32, #tpu.memory_space<vmem>>, vector<24x1xi32>
      %13 = vector.broadcast %11 : vector<24x1xi32> to vector<24x128xi32>
      %14 = arith.cmpi eq, %10, %13 : vector<24x128xi32>
      %15 = vector.broadcast %12 : vector<24x1xi32> to vector<24x128xi32>
      %16 = arith.cmpi eq, %10, %15 : vector<24x128xi32>
      %17 = arith.ori %14, %16 : vector<24x128xi1>
      %18 = arith.extui %17 : vector<24x128xi1> to vector<24x128xi32>
      %19 = arith.sitofp %18 : vector<24x128xi32> to vector<24x128xf32>
      %20 = arith.truncf %19 : vector<24x128xf32> to vector<24x128xbf16>
      %c0_11 = arith.constant 0 : index
      %c0_12 = arith.constant 0 : index
      %21 = vector.load %arg3[%c0_11, %c0_12] : memref<128x128xbf16, #tpu.memory_space<vmem>>, vector<128x128xbf16>
      %cst_13 = arith.constant dense<0.000000e+00> : vector<24x128xf32>
      %22 = tpu.matmul %20, %21, %cst_13 {dimension_numbers = #tpu.dot_dimension_numbers<[1], [0], [0], [1], [0, 0, 1, 1], [], []>} : vector<24x128xbf16>, vector<128x128xbf16>, vector<24x128xf32> -> vector<24x128xf32>
      %23 = arith.truncf %22 : vector<24x128xf32> to vector<24x128xbf16>
      %c0_14 = arith.constant 0 : index
      %c0_15 = arith.constant 0 : index
      %24 = vector.load %arg7[%c0_14, %c0_15] : memref<24x512xbf16, #tpu.memory_space<vmem>>, vector<24x128xbf16>
      tpu.vector_store %arg7[%c0_14, %c0_15], %23 {strides = array<i32>} : memref<24x512xbf16, #tpu.memory_space<vmem>>, vector<24x128xbf16>,
      %c0_16 = arith.constant 0 : index
      %c2 = arith.constant 2 : index
      %25 = vector.load %arg2[%c0_16, %c2] : memref<24x8xi32, #tpu.memory_space<vmem>>, vector<24x1xi32>
      %c0_17 = arith.constant 0 : index
      %c3 = arith.constant 3 : index
      %26 = vector.load %arg2[%c0_17, %c3] : memref<24x8xi32, #tpu.memory_space<vmem>>, vector<24x1xi32>
      %27 = vector.broadcast %25 : vector<24x1xi32> to vector<24x128xi32>
      %28 = arith.cmpi eq, %10, %27 : vector<24x128xi32>
      %29 = vector.broadcast %26 : vector<24x1xi32> to vector<24x128xi32>
      %30 = arith.cmpi eq, %10, %29 : vector<24x128xi32>
      %31 = arith.ori %28, %30 : vector<24x128xi1>
      %32 = arith.extui %31 : vector<24x128xi1> to vector<24x128xi32>
      %33 = arith.sitofp %32 : vector<24x128xi32> to vector<24x128xf32>
      %34 = arith.truncf %33 : vector<24x128xf32> to vector<24x128xbf16>
      %c0_18 = arith.constant 0 : index
      %c0_19 = arith.constant 0 : index
      %35 = vector.load %arg3[%c0_18, %c0_19] : memref<128x128xbf16, #tpu.memory_space<vmem>>, vector<128x128xbf16>
      %cst_20 = arith.constant dense<0.000000e+00> : vector<24x128xf32>
      %36 = tpu.matmul %34, %35, %cst_20 {dimension_numbers = #tpu.dot_dimension_numbers<[1], [0], [0], [1], [0, 0, 1, 1], [], []>} : vector<24x128xbf16>, vector<128x128xbf16>, vector<24x128xf32> -> vector<24x128xf32>
      %37 = arith.truncf %36 : vector<24x128xf32> to vector<24x128xbf16>
      %c0_21 = arith.constant 0 : index
      %c128 = arith.constant 128 : index
      %38 = vector.load %arg7[%c0_21, %c128] : memref<24x512xbf16, #tpu.memory_space<vmem>>, vector<24x128xbf16>
      tpu.vector_store %arg7[%c0_21, %c128], %37 {strides = array<i32>} : memref<24x512xbf16, #tpu.memory_space<vmem>>, vector<24x128xbf16>,
      %c0_22 = arith.constant 0 : index
      %c4 = arith.constant 4 : index
      %39 = vector.load %arg2[%c0_22, %c4] : memref<24x8xi32, #tpu.memory_space<vmem>>, vector<24x1xi32>
      %c0_23 = arith.constant 0 : index
      %c5 = arith.constant 5 : index
      %40 = vector.load %arg2[%c0_23, %c5] : memref<24x8xi32, #tpu.memory_space<vmem>>, vector<24x1xi32>
      %41 = vector.broadcast %39 : vector<24x1xi32> to vector<24x128xi32>
      %42 = arith.cmpi eq, %10, %41 : vector<24x128xi32>
      %43 = vector.broadcast %40 : vector<24x1xi32> to vector<24x128xi32>
      %44 = arith.cmpi eq, %10, %43 : vector<24x128xi32>
      %45 = arith.ori %42, %44 : vector<24x128xi1>
      %46 = arith.extui %45 : vector<24x128xi1> to vector<24x128xi32>
      %47 = arith.sitofp %46 : vector<24x128xi32> to vector<24x128xf32>
      %48 = arith.truncf %47 : vector<24x128xf32> to vector<24x128xbf16>
      %c0_24 = arith.constant 0 : index
      %c0_25 = arith.constant 0 : index
      %49 = vector.load %arg3[%c0_24, %c0_25] : memref<128x128xbf16, #tpu.memory_space<vmem>>, vector<128x128xbf16>
      %cst_26 = arith.constant dense<0.000000e+00> : vector<24x128xf32>
      %50 = tpu.matmul %48, %49, %cst_26 {dimension_numbers = #tpu.dot_dimension_numbers<[1], [0], [0], [1], [0, 0, 1, 1], [], []>} : vector<24x128xbf16>, vector<128x128xbf16>, vector<24x128xf32> -> vector<24x128xf32>
      %51 = arith.truncf %50 : vector<24x128xf32> to vector<24x128xbf16>
      %c0_27 = arith.constant 0 : index
      %c256 = arith.constant 256 : index
      %52 = vector.load %arg7[%c0_27, %c256] : memref<24x512xbf16, #tpu.memory_space<vmem>>, vector<24x128xbf16>
      tpu.vector_store %arg7[%c0_27, %c256], %51 {strides = array<i32>} : memref<24x512xbf16, #tpu.memory_space<vmem>>, vector<24x128xbf16>,
      %c0_28 = arith.constant 0 : index
      %c6 = arith.constant 6 : index
      %53 = vector.load %arg2[%c0_28, %c6] : memref<24x8xi32, #tpu.memory_space<vmem>>, vector<24x1xi32>
      %c0_29 = arith.constant 0 : index
      %c7 = arith.constant 7 : index
      %54 = vector.load %arg2[%c0_29, %c7] : memref<24x8xi32, #tpu.memory_space<vmem>>, vector<24x1xi32>
      %55 = vector.broadcast %53 : vector<24x1xi32> to vector<24x128xi32>
      %56 = arith.cmpi eq, %10, %55 : vector<24x128xi32>
      %57 = vector.broadcast %54 : vector<24x1xi32> to vector<24x128xi32>
      %58 = arith.cmpi eq, %10, %57 : vector<24x128xi32>
      %59 = arith.ori %56, %58 : vector<24x128xi1>
      %60 = arith.extui %59 : vector<24x128xi1> to vector<24x128xi32>
      %61 = arith.sitofp %60 : vector<24x128xi32> to vector<24x128xf32>
      %62 = arith.truncf %61 : vector<24x128xf32> to vector<24x128xbf16>
      %c0_30 = arith.constant 0 : index
      %c0_31 = arith.constant 0 : index
      %63 = vector.load %arg3[%c0_30, %c0_31] : memref<128x128xbf16, #tpu.memory_space<vmem>>, vector<128x128xbf16>
      %cst_32 = arith.constant dense<0.000000e+00> : vector<24x128xf32>
      %64 = tpu.matmul %62, %63, %cst_32 {dimension_numbers = #tpu.dot_dimension_numbers<[1], [0], [0], [1], [0, 0, 1, 1], [], []>} : vector<24x128xbf16>, vector<128x128xbf16>, vector<24x128xf32> -> vector<24x128xf32>
      %65 = arith.truncf %64 : vector<24x128xf32> to vector<24x128xbf16>
      %c0_33 = arith.constant 0 : index
      %c384 = arith.constant 384 : index
      %66 = vector.load %arg7[%c0_33, %c384] : memref<24x512xbf16, #tpu.memory_space<vmem>>, vector<24x128xbf16>
      tpu.vector_store %arg7[%c0_33, %c384], %65 {strides = array<i32>} : memref<24x512xbf16, #tpu.memory_space<vmem>>, vector<24x128xbf16>,
    } else {
    }
    %c0 = arith.constant 0 : index
    %c0_1 = arith.constant 0 : index
    %3 = vector.load %arg7[%c0, %c0_1] : memref<24x512xbf16, #tpu.memory_space<vmem>>, vector<24x512xbf16>
    %c0_2 = arith.constant 0 : index
    %c0_3 = arith.constant 0 : index
    %4 = vector.load %arg4[%c0_2, %c0_3] : memref<512x128xbf16, #tpu.memory_space<vmem>>, vector<512x128xbf16>
    %cst = arith.constant dense<0.000000e+00> : vector<24x128xf32>
    %5 = tpu.matmul %3, %4, %cst {dimension_numbers = #tpu.dot_dimension_numbers<[1], [0], [0], [1], [0, 0, 1, 1], [], []>} : vector<24x512xbf16>, vector<512x128xbf16>, vector<24x128xf32> -> vector<24x128xf32>
    %c0_4 = arith.constant 0 : index
    %c0_5 = arith.constant 0 : index
    %6 = vector.load %arg5[%c0_4, %c0_5] : memref<1x128xf32, #tpu.memory_space<vmem>>, vector<1x128xf32>
    %7 = vector.broadcast %6 : vector<1x128xf32> to vector<24x128xf32>
    %8 = arith.addf %5, %7 : vector<24x128xf32>
    %c0_6 = arith.constant 0 : index
    %c0_7 = arith.constant 0 : index
    %9 = vector.load %arg6[%c0_6, %c0_7] : memref<24x128xf32, #tpu.memory_space<vmem>>, vector<24x128xf32>
    tpu.vector_store %arg6[%c0_6, %c0_7], %8 {strides = array<i32>} : memref<24x128xf32, #tpu.memory_space<vmem>>, vector<24x128xf32>,
    return
  }
  func.func @transform_0(%arg0: i32, %arg1: i32) -> (i32, i32) {
    %c0_i32 = arith.constant 0 : i32
    %c0_i32_0 = arith.constant 0 : i32
    return %arg0, %c0_i32 : i32, i32
  }
  func.func @transform_1(%arg0: i32, %arg1: i32) -> (i32, i32) {
    %c0_i32 = arith.constant 0 : i32
    %c0_i32_0 = arith.constant 0 : i32
    %c0_i32_1 = arith.constant 0 : i32
    return %c0_i32, %c0_i32_0 : i32, i32
  }
  func.func @transform_2(%arg0: i32, %arg1: i32) -> (i32, i32) {
    %c0_i32 = arith.constant 0 : i32
    %c0_i32_0 = arith.constant 0 : i32
    return %c0_i32, %arg1 : i32, i32
  }
  func.func @transform_3(%arg0: i32, %arg1: i32) -> (i32, i32) {
    %c0_i32 = arith.constant 0 : i32
    %c0_i32_0 = arith.constant 0 : i32
    return %c0_i32, %arg1 : i32, i32
  }
  func.func @transform_4(%arg0: i32, %arg1: i32) -> (i32, i32) {
    %c0_i32 = arith.constant 0 : i32
    return %arg0, %arg1 : i32, i32
  }
}

</mosaic_0001>

<llo_original>
// kernel: tpu_custom_call.1
$region0: #{tpu_custom_call.1}
  #allocation0 [shape = 'u32[]', space=smem, size = 0x4, offset = 0x4, fixed_abs, tag = 'smem constant byte address 0x4 - core index']
  #allocation1 [shape = 'u32[144,128]{1,0:T(1,128)}', space=vmem, size = 0x12000, scoped, tag = 'internal scratch']
  #allocation2 [shape = 'bf16[24,512]{1,0:T(8,128)(2,1)}', space=vmem, size = 0x6000, scoped, tag = 'scratch operand']
  %s0 = inlined_call_operand.vmem [shape: s32[24,8], index: 0, kind: input, shape index: {}]
  %s1 = inlined_call_operand.hbm [shape: bf16[128,128], index: 1, kind: input, shape index: {}]
  %s2 = inlined_call_operand.hbm [shape: bf16[512,128], index: 2, kind: input, shape index: {}]
  %s3 = inlined_call_operand.vmem [shape: f32[1,128], index: 3, kind: input, shape index: {}]
  %s4 = inlined_call_operand.hbm [shape: f32[24,128], index: 4, kind: output, shape index: {}]
  %s5 = sld [smem:[#allocation0]]
  $region38: #{tpu_custom_call.1} parent=0
    _
  %s7 = ssub.s32 1, %s5
  %s8 = scalar_select 0, %s7, %s5
  $region1: #{tpu_custom_call.1} parent=0
    #allocation3 [shape = 'u8[32768]{0}', space=vmem, size = 0x8000, scoped, tag = 'input window, operand 1, single buffered']
    #allocation4 [shape = 's32[1]{0}', space=sflag, size = 0x4, scoped, tag = 'scoped memory for tpu_custom_call.1']
    #allocation5 [shape = 's32[1]{0}', space=sflag, size = 0x4, scoped, tag = 'scoped memory for tpu_custom_call.1']
    #allocation6 [shape = 'u8[131072]{0}', space=vmem, size = 0x20000, scoped, tag = 'input window, operand 2, single buffered']
    #allocation7 [shape = 's32[1]{0}', space=sflag, size = 0x4, scoped, tag = 'scoped memory for tpu_custom_call.1']
    #allocation8 [shape = 'u8[12288]{0}', space=vmem, size = 0x3000, scoped, tag = 'output window, operand 0, single buffered']
    %9 = vsyncpa [#allocation4], 0
    %10 = vsyncpa [#allocation7], 0
    %11 = vsyncpa [#allocation5], 0
    // Predicated region
    $region2: #{tpu_custom_call.1} parent=1 // pred_check
      _
    $region3: #{tpu_custom_call.1} parent=1 // pred_check_branch
      %13 = sbr.rel (0) target = $region5
    $region4: #{tpu_custom_call.1} parent=1 // pred_region
      _
    $region5: #{tpu_custom_call.1} parent=1 // pred_fallthru
      _
    // Predicated region
    $region6: #{tpu_custom_call.1} parent=1 // pred_check
      _
    $region7: #{tpu_custom_call.1} parent=1 // pred_check_branch
      %15 = sbr.rel (0) target = $region9
    $region8: #{tpu_custom_call.1} parent=1 // pred_region
      %s17 = ssub.s32 1024, 1024
      %18 = vsyncadd [#allocation4], %s17
      %s19 = sshll.u32 [#allocation3], 4
      %s20 = int_to_ptr.vmem [resolvable:$true] %s19
      %25 = dma.hbm_to_vmem [thread:$0]  %s1, 1024, %s20, [#allocation4], 64, 64, 4
    $region9: #{tpu_custom_call.1} parent=1 // pred_fallthru
      _
    // Predicated region
    $region10: #{tpu_custom_call.1} parent=1 // pred_check
      _
    $region11: #{tpu_custom_call.1} parent=1 // pred_check_branch
      %27 = sbr.rel (0) target = $region13
    $region12: #{tpu_custom_call.1} parent=1 // pred_region
      %s29 = ssub.s32 4096, 4096
      %30 = vsyncadd [#allocation7], %s29
      %s31 = sshll.u32 [#allocation6], 4
      %s32 = int_to_ptr.vmem [resolvable:$true] %s31
      %37 = dma.hbm_to_vmem [thread:$0]  %s2, 4096, %s32, [#allocation7], 64, 64, 4
    $region13: #{tpu_custom_call.1} parent=1 // pred_fallthru
      _
    // Predicated region
    $region14: #{tpu_custom_call.1} parent=1 // pred_check
      _
    $region15: #{tpu_custom_call.1} parent=1 // pred_check_branch
      %39 = sbr.rel (0) target = $region17
    $region16: #{tpu_custom_call.1} parent=1 // pred_region
      _
    $region17: #{tpu_custom_call.1} parent=1 // pred_fallthru
      _
    // Predicated region
    $region18: #{tpu_custom_call.1} parent=1 // pred_check
      _
    $region19: #{tpu_custom_call.1} parent=1 // pred_check_branch
      %41 = sbr.rel (0) target = $region21
    $region20: #{tpu_custom_call.1} parent=1 // pred_region
      %42 = dma.done [#allocation4], 1024
    $region21: #{tpu_custom_call.1} parent=1 // pred_fallthru
      _
    // Predicated region
    $region22: #{tpu_custom_call.1} parent=1 // pred_check
      _
    $region23: #{tpu_custom_call.1} parent=1 // pred_check_branch
      %44 = sbr.rel (0) target = $region25
    $region24: #{tpu_custom_call.1} parent=1 // pred_region
      %45 = dma.done [#allocation7], 4096
    $region25: #{tpu_custom_call.1} parent=1 // pred_fallthru
      _
    %p47 = scmp.eq.s32.totalorder 0, 0
    // Predicated region
    $region26: #{tpu_custom_call.1} parent=1 // pred_check
      %p48 = pneg %p47
    $region27: #{tpu_custom_call.1} parent=1 // pred_check_branch
      %50 = sbr.rel (%p48) target = $region29
    $region28: #{tpu_custom_call.1} parent=1 // pred_region
      %v51 = vlaneseq
      %v52 = vand.u32 %v51, 127
      %v53 = vld [vmem:[%s0] sm:$0xff]
      %v54 = vld [vmem:[%s0 + $0x8] sm:$0xff]
      %v55 = vld [vmem:[%s0 + $0x10] sm:$0xff]
      %56 = vset.pattern.permute.xlu0 0
      %57 = vperm.xlu0 %56, %v53
      %v58 = vpop.permute.xlu0 %57
      %59 = vset.pattern.permute.xlu0 0
      %60 = vperm.xlu0 %59, %v54
      %v61 = vpop.permute.xlu0 %60
      %62 = vset.pattern.permute.xlu0 0
      %63 = vperm.xlu0 %62, %v55
      %v64 = vpop.permute.xlu0 %63
      %vm65 = vcmp.eq.s32.totalorder %v52, %v58
      %vm66 = vcmp.eq.s32.totalorder %v52, %v61
      %vm67 = vcmp.eq.s32.totalorder %v52, %v64
      %68 = vset.pattern.permute.xlu0 1
      %69 = vperm.xlu0 %68, %v53
      %v70 = vpop.permute.xlu0 %69
      %71 = vset.pattern.permute.xlu0 1
      %72 = vperm.xlu0 %71, %v54
      %v73 = vpop.permute.xlu0 %72
      %74 = vset.pattern.permute.xlu0 1
      %75 = vperm.xlu0 %74, %v55
      %v76 = vpop.permute.xlu0 %75
      %vm77 = vcmp.eq.s32.totalorder %v52, %v70
      %vm78 = vcmp.eq.s32.totalorder %v52, %v73
      %vm79 = vcmp.eq.s32.totalorder %v52, %v76
      %vm80 = vmor %vm65, %vm77
      %vm81 = vmor %vm66, %vm78
      %vm82 = vmor %vm67, %vm79
      %v83 = vsel %vm80, 1, 0
      %v84 = vsel %vm81, 1, 0
      %v85 = vsel %vm82, 1, 0
      %v86 = vcvt.s32.f32 %v83
      %v87 = vcvt.s32.f32 %v84
      %v88 = vcvt.s32.f32 %v85
      %v89 = vpack.c.bf16 %v87, %v86
      %v90 = vpack.c.bf16 %v88, %v88
      %v91 = vld [vmem:[#allocation3] sm:$0xf]
      %v92 = vld [vmem:[#allocation3 + $0x4] sm:$0xf]
      %v93 = vld [vmem:[#allocation3 + $0x8] sm:$0xf]
      %v94 = vld [vmem:[#allocation3 + $0xc] sm:$0xf]
      %v95 = vld [vmem:[#allocation3 + $0x10] sm:$0xf]
      %v96 = vld [vmem:[#allocation3 + $0x14] sm:$0xf]
      %v97 = vld [vmem:[#allocation3 + $0x18] sm:$0xf]
      %v98 = vld [vmem:[#allocation3 + $0x1c] sm:$0xf]
      %v99 = vld [vmem:[#allocation3 + $0x20] sm:$0xf]
      %v100 = vld [vmem:[#allocation3 + $0x24] sm:$0xf]
      %v101 = vld [vmem:[#allocation3 + $0x28] sm:$0xf]
      %v102 = vld [vmem:[#allocation3 + $0x2c] sm:$0xf]
      %v103 = vld [vmem:[#allocation3 + $0x30] sm:$0xf]
      %v104 = vld [vmem:[#allocation3 + $0x34] sm:$0xf]
      %v105 = vld [vmem:[#allocation3 + $0x38] sm:$0xf]
      %v106 = vld [vmem:[#allocation3 + $0x3c] sm:$0xf]
      %v123 = vunpack.c.l.b16 %v91
      %v124 = vunpack.c.l.b16 %v92
      %v125 = vunpack.c.l.b16 %v93
      %v126 = vunpack.c.l.b16 %v94
      %v127 = vunpack.c.l.b16 %v95
      %v128 = vunpack.c.l.b16 %v96
      %v129 = vunpack.c.l.b16 %v97
      %v130 = vunpack.c.l.b16 %v98
      %v131 = vunpack.c.l.b16 %v99
      %v132 = vunpack.c.l.b16 %v100
      %v133 = vunpack.c.l.b16 %v101
      %v134 = vunpack.c.l.b16 %v102
      %v135 = vunpack.c.l.b16 %v103
      %v136 = vunpack.c.l.b16 %v104
      %v137 = vunpack.c.l.b16 %v105
      %v138 = vunpack.c.l.b16 %v106
      %v139 = vpack.c.b16 %v124, %v123
      %v140 = vpack.c.b16 %v126, %v125
      %v141 = vpack.c.b16 %v128, %v127
      %v142 = vpack.c.b16 %v130, %v129
      %v143 = vpack.c.b16 %v132, %v131
      %v144 = vpack.c.b16 %v134, %v133
      %v145 = vpack.c.b16 %v136, %v135
      %v146 = vpack.c.b16 %v138, %v137
      %155 = vmatprep.subr.bf16.mxu0 0
      %156 = vmatpush1.bf16.msra.mxu0 %v146
      %157 = vmatprep.subr.bf16.mxu0 0
      %158 = vmatpush1.bf16.msra.mxu0 %v145
      %159 = vmatprep.subr.bf16.mxu0 0
      %160 = vmatpush1.bf16.msra.mxu0 %v144
      %161 = vmatprep.subr.bf16.mxu0 0
      %162 = vmatpush1.bf16.msra.mxu0 %v143
      %163 = vmatprep.subr.bf16.mxu0 0
      %164 = vmatpush1.bf16.msra.mxu0 %v142
      %165 = vmatprep.subr.bf16.mxu0 0
      %166 = vmatpush1.bf16.msra.mxu0 %v141
      %167 = vmatprep.subr.bf16.mxu0 0
      %168 = vmatpush1.bf16.msra.mxu0 %v140
      %169 = vmatprep.subr.bf16.mxu0 0
      %170 = vmatpush1.bf16.msra.mxu0 %v139
      %171 = vmatprep.subr.bf16.mxu0 0
      %172 = vmatpush2.bf16.msra.mxu0 0
      %173 = vmatprep.subr.bf16.mxu0 0
      %174 = vmatpush2.bf16.msra.mxu0 0
      %175 = vmatprep.subr.bf16.mxu0 0
      %176 = vmatpush2.bf16.msra.mxu0 0
      %177 = vmatprep.subr.bf16.mxu0 0
      %178 = vmatpush2.bf16.msra.mxu0 0
      %179 = vmatprep.subr.bf16.mxu0 0
      %180 = vmatpush2.bf16.msra.mxu0 0
      %181 = vmatprep.subr.bf16.mxu0 0
      %182 = vmatpush2.bf16.msra.mxu0 0
      %183 = vmatprep.subr.bf16.mxu0 0
      %184 = vmatpush2.bf16.msra.mxu0 0
      %185 = vmatprep.subr.bf16.mxu0 0
      %186 = vmatpush2.bf16.msra.mxu0 0
      %187 = vmatprep.mubr.bf16.mxu0 0
      %188 = vmatmul.mubr.bf16.gmra.mxu0 %v89
      %v189 = vpop.f32.mrf.mxu0
      %v190 = vadd.f32 0.0, %v189
      %v191 = vpop.f32.mrf.mxu0
      %v192 = vpop.f32.mrf.mxu0
      %v193 = vadd.f32 0.0, %v192
      %v194 = vpop.f32.mrf.mxu0
      %195 = vmatprep.mubr.bf16.mxu0 0
      %196 = vmatmul.mubr.bf16.gmra.mxu0 %v90
      %v197 = vpop.f32.mrf.mxu0
      %v198 = vadd.f32 0.0, %v197
      %v199 = vpop.f32.mrf.mxu0
      %v200 = vpop.f32.mrf.mxu0
      %v201 = vpop.f32.mrf.mxu0
      %202 = vdwg.mxu0
      %v203 = vpack.c.bf16 %v193, %v190
      %v204 = vpack.c.bf16 %v198, %v198
      %v207 = vunpack.c.l.b16 %v203
      %v208 = vunpack.c.h.b16 %v203
      %v209 = vunpack.c.l.b16 %v204
      %v210 = vpack.c.b16 %v207, %v207
      %v211 = vpack.c.b16 %v208, %v208
      %v212 = vpack.c.b16 %v209, %v209
      %216 = vst [vmem:[#allocation2] sm:$0xf] %v210
      %217 = vst [vmem:[#allocation2 + $0x10] sm:$0xf] %v211
      %218 = vst [vmem:[#allocation2 + $0x20] sm:$0xf] %v212
      %v219 = vld [vmem:[%s0] sm:$0xff]
      %v220 = vld [vmem:[%s0 + $0x8] sm:$0xff]
      %v221 = vld [vmem:[%s0 + $0x10] sm:$0xff]
      %222 = vset.pattern.permute.xlu0 2
      %223 = vperm.xlu0 %222, %v219
      %v224 = vpop.permute.xlu0 %223
      %225 = vset.pattern.permute.xlu0 2
      %226 = vperm.xlu0 %225, %v220
      %v227 = vpop.permute.xlu0 %226
      %228 = vset.pattern.permute.xlu0 2
      %229 = vperm.xlu0 %228, %v221
      %v230 = vpop.permute.xlu0 %229
      %vm231 = vcmp.eq.s32.totalorder %v52, %v224
      %vm232 = vcmp.eq.s32.totalorder %v52, %v227
      %vm233 = vcmp.eq.s32.totalorder %v52, %v230
      %234 = vset.pattern.permute.xlu0 3
      %235 = vperm.xlu0 %234, %v219
      %v236 = vpop.permute.xlu0 %235
      %237 = vset.pattern.permute.xlu0 3
      %238 = vperm.xlu0 %237, %v220
      %v239 = vpop.permute.xlu0 %238
      %240 = vset.pattern.permute.xlu0 3
      %241 = vperm.xlu0 %240, %v221
      %v242 = vpop.permute.xlu0 %241
      %vm243 = vcmp.eq.s32.totalorder %v52, %v236
      %vm244 = vcmp.eq.s32.totalorder %v52, %v239
      %vm245 = vcmp.eq.s32.totalorder %v52, %v242
      %vm246 = vmor %vm231, %vm243
      %vm247 = vmor %vm232, %vm244
      %vm248 = vmor %vm233, %vm245
      %v249 = vsel %vm246, 1, 0
      %v250 = vsel %vm247, 1, 0
      %v251 = vsel %vm248, 1, 0
      %v252 = vcvt.s32.f32 %v249
      %v253 = vcvt.s32.f32 %v250
      %v254 = vcvt.s32.f32 %v251
      %v255 = vpack.c.bf16 %v253, %v252
      %v256 = vpack.c.bf16 %v254, %v254
      %v257 = vld [vmem:[#allocation3] sm:$0xf]
      %v258 = vld [vmem:[#allocation3 + $0x4] sm:$0xf]
      %v259 = vld [vmem:[#allocation3 + $0x8] sm:$0xf]
      %v260 = vld [vmem:[#allocation3 + $0xc] sm:$0xf]
      %v261 = vld [vmem:[#allocation3 + $0x10] sm:$0xf]
      %v262 = vld [vmem:[#allocation3 + $0x14] sm:$0xf]
      %v263 = vld [vmem:[#allocation3 + $0x18] sm:$0xf]
      %v264 = vld [vmem:[#allocation3 + $0x1c] sm:$0xf]
      %v265 = vld [vmem:[#allocation3 + $0x20] sm:$0xf]
      %v266 = vld [vmem:[#allocation3 + $0x24] sm:$0xf]
      %v267 = vld [vmem:[#allocation3 + $0x28] sm:$0xf]
      %v268 = vld [vmem:[#allocation3 + $0x2c] sm:$0xf]
      %v269 = vld [vmem:[#allocation3 + $0x30] sm:$0xf]
      %v270 = vld [vmem:[#allocation3 + $0x34] sm:$0xf]
      %v271 = vld [vmem:[#allocation3 + $0x38] sm:$0xf]
      %v272 = vld [vmem:[#allocation3 + $0x3c] sm:$0xf]
      %v289 = vunpack.c.l.b16 %v257
      %v290 = vunpack.c.l.b16 %v258
      %v291 = vunpack.c.l.b16 %v259
      %v292 = vunpack.c.l.b16 %v260
      %v293 = vunpack.c.l.b16 %v261
      %v294 = vunpack.c.l.b16 %v262
      %v295 = vunpack.c.l.b16 %v263
      %v296 = vunpack.c.l.b16 %v264
      %v297 = vunpack.c.l.b16 %v265
      %v298 = vunpack.c.l.b16 %v266
      %v299 = vunpack.c.l.b16 %v267
      %v300 = vunpack.c.l.b16 %v268
      %v301 = vunpack.c.l.b16 %v269
      %v302 = vunpack.c.l.b16 %v270
      %v303 = vunpack.c.l.b16 %v271
      %v304 = vunpack.c.l.b16 %v272
      %v305 = vpack.c.b16 %v290, %v289
      %v306 = vpack.c.b16 %v292, %v291
      %v307 = vpack.c.b16 %v294, %v293
      %v308 = vpack.c.b16 %v296, %v295
      %v309 = vpack.c.b16 %v298, %v297
      %v310 = vpack.c.b16 %v300, %v299
      %v311 = vpack.c.b16 %v302, %v301
      %v312 = vpack.c.b16 %v304, %v303
      %321 = vmatprep.subr.bf16.mxu0 0
      %322 = vmatpush1.bf16.msra.mxu0 %v312
      %323 = vmatprep.subr.bf16.mxu0 0
      %324 = vmatpush1.bf16.msra.mxu0 %v311
      %325 = vmatprep.subr.bf16.mxu0 0
      %326 = vmatpush1.bf16.msra.mxu0 %v310
      %327 = vmatprep.subr.bf16.mxu0 0
      %328 = vmatpush1.bf16.msra.mxu0 %v309
      %329 = vmatprep.subr.bf16.mxu0 0
      %330 = vmatpush1.bf16.msra.mxu0 %v308
      %331 = vmatprep.subr.bf16.mxu0 0
      %332 = vmatpush1.bf16.msra.mxu0 %v307
      %333 = vmatprep.subr.bf16.mxu0 0
      %334 = vmatpush1.bf16.msra.mxu0 %v306
      %335 = vmatprep.subr.bf16.mxu0 0
      %336 = vmatpush1.bf16.msra.mxu0 %v305
      %337 = vmatprep.subr.bf16.mxu0 0
      %338 = vmatpush2.bf16.msra.mxu0 0
      %339 = vmatprep.subr.bf16.mxu0 0
      %340 = vmatpush2.bf16.msra.mxu0 0
      %341 = vmatprep.subr.bf16.mxu0 0
      %342 = vmatpush2.bf16.msra.mxu0 0
      %343 = vmatprep.subr.bf16.mxu0 0
      %344 = vmatpush2.bf16.msra.mxu0 0
      %345 = vmatprep.subr.bf16.mxu0 0
      %346 = vmatpush2.bf16.msra.mxu0 0
      %347 = vmatprep.subr.bf16.mxu0 0
      %348 = vmatpush2.bf16.msra.mxu0 0
      %349 = vmatprep.subr.bf16.mxu0 0
      %350 = vmatpush2.bf16.msra.mxu0 0
      %351 = vmatprep.subr.bf16.mxu0 0
      %352 = vmatpush2.bf16.msra.mxu0 0
      %353 = vmatprep.mubr.bf16.mxu0 0
      %354 = vmatmul.mubr.bf16.gmra.mxu0 %v255
      %v355 = vpop.f32.mrf.mxu0
      %v356 = vadd.f32 0.0, %v355
      %v357 = vpop.f32.mrf.mxu0
      %v358 = vpop.f32.mrf.mxu0
      %v359 = vadd.f32 0.0, %v358
      %v360 = vpop.f32.mrf.mxu0
      %361 = vmatprep.mubr.bf16.mxu0 0
      %362 = vmatmul.mubr.bf16.gmra.mxu0 %v256
      %v363 = vpop.f32.mrf.mxu0
      %v364 = vadd.f32 0.0, %v363
      %v365 = vpop.f32.mrf.mxu0
      %v366 = vpop.f32.mrf.mxu0
      %v367 = vpop.f32.mrf.mxu0
      %368 = vdwg.mxu0
      %v369 = vpack.c.bf16 %v359, %v356
      %v370 = vpack.c.bf16 %v364, %v364
      %v373 = vunpack.c.l.b16 %v369
      %v374 = vunpack.c.h.b16 %v369
      %v375 = vunpack.c.l.b16 %v370
      %v376 = vpack.c.b16 %v373, %v373
      %v377 = vpack.c.b16 %v374, %v374
      %v378 = vpack.c.b16 %v375, %v375
      %382 = vst [vmem:[#allocation2 + $0x4] sm:$0xf] %v376
      %383 = vst [vmem:[#allocation2 + $0x14] sm:$0xf] %v377
      %384 = vst [vmem:[#allocation2 + $0x24] sm:$0xf] %v378
      %v385 = vld [vmem:[%s0] sm:$0xff]
      %v386 = vld [vmem:[%s0 + $0x8] sm:$0xff]
      %v387 = vld [vmem:[%s0 + $0x10] sm:$0xff]
      %388 = vset.pattern.permute.xlu0 4
      %389 = vperm.xlu0 %388, %v385
      %v390 = vpop.permute.xlu0 %389
      %391 = vset.pattern.permute.xlu0 4
      %392 = vperm.xlu0 %391, %v386
      %v393 = vpop.permute.xlu0 %392
      %394 = vset.pattern.permute.xlu0 4
      %395 = vperm.xlu0 %394, %v387
      %v396 = vpop.permute.xlu0 %395
      %vm397 = vcmp.eq.s32.totalorder %v52, %v390
      %vm398 = vcmp.eq.s32.totalorder %v52, %v393
      %vm399 = vcmp.eq.s32.totalorder %v52, %v396
      %400 = vset.pattern.permute.xlu0 5
      %401 = vperm.xlu0 %400, %v385
      %v402 = vpop.permute.xlu0 %401
      %403 = vset.pattern.permute.xlu0 5
      %404 = vperm.xlu0 %403, %v386
      %v405 = vpop.permute.xlu0 %404
      %406 = vset.pattern.permute.xlu0 5
      %407 = vperm.xlu0 %406, %v387
      %v408 = vpop.permute.xlu0 %407
      %vm409 = vcmp.eq.s32.totalorder %v52, %v402
      %vm410 = vcmp.eq.s32.totalorder %v52, %v405
      %vm411 = vcmp.eq.s32.totalorder %v52, %v408
      %vm412 = vmor %vm397, %vm409
      %vm413 = vmor %vm398, %vm410
      %vm414 = vmor %vm399, %vm411
      %v415 = vsel %vm412, 1, 0
      %v416 = vsel %vm413, 1, 0
      %v417 = vsel %vm414, 1, 0
      %v418 = vcvt.s32.f32 %v415
      %v419 = vcvt.s32.f32 %v416
      %v420 = vcvt.s32.f32 %v417
      %v421 = vpack.c.bf16 %v419, %v418
      %v422 = vpack.c.bf16 %v420, %v420
      %v423 = vld [vmem:[#allocation3] sm:$0xf]
      %v424 = vld [vmem:[#allocation3 + $0x4] sm:$0xf]
      %v425 = vld [vmem:[#allocation3 + $0x8] sm:$0xf]
      %v426 = vld [vmem:[#allocation3 + $0xc] sm:$0xf]
      %v427 = vld [vmem:[#allocation3 + $0x10] sm:$0xf]
      %v428 = vld [vmem:[#allocation3 + $0x14] sm:$0xf]
      %v429 = vld [vmem:[#allocation3 + $0x18] sm:$0xf]
      %v430 = vld [vmem:[#allocation3 + $0x1c] sm:$0xf]
      %v431 = vld [vmem:[#allocation3 + $0x20] sm:$0xf]
      %v432 = vld [vmem:[#allocation3 + $0x24] sm:$0xf]
      %v433 = vld [vmem:[#allocation3 + $0x28] sm:$0xf]
      %v434 = vld [vmem:[#allocation3 + $0x2c] sm:$0xf]
      %v435 = vld [vmem:[#allocation3 + $0x30] sm:$0xf]
      %v436 = vld [vmem:[#allocation3 + $0x34] sm:$0xf]
      %v437 = vld [vmem:[#allocation3 + $0x38] sm:$0xf]
      %v438 = vld [vmem:[#allocation3 + $0x3c] sm:$0xf]
      %v455 = vunpack.c.l.b16 %v423
      %v456 = vunpack.c.l.b16 %v424
      %v457 = vunpack.c.l.b16 %v425
      %v458 = vunpack.c.l.b16 %v426
      %v459 = vunpack.c.l.b16 %v427
      %v460 = vunpack.c.l.b16 %v428
      %v461 = vunpack.c.l.b16 %v429
      %v462 = vunpack.c.l.b16 %v430
      %v463 = vunpack.c.l.b16 %v431
      %v464 = vunpack.c.l.b16 %v432
      %v465 = vunpack.c.l.b16 %v433
      %v466 = vunpack.c.l.b16 %v434
      %v467 = vunpack.c.l.b16 %v435
      %v468 = vunpack.c.l.b16 %v436
      %v469 = vunpack.c.l.b16 %v437
      %v470 = vunpack.c.l.b16 %v438
      %v471 = vpack.c.b16 %v456, %v455
      %v472 = vpack.c.b16 %v458, %v457
      %v473 = vpack.c.b16 %v460, %v459
      %v474 = vpack.c.b16 %v462, %v461
      %v475 = vpack.c.b16 %v464, %v463
      %v476 = vpack.c.b16 %v466, %v465
      %v477 = vpack.c.b16 %v468, %v467
      %v478 = vpack.c.b16 %v470, %v469
      %487 = vmatprep.subr.bf16.mxu0 0
      %488 = vmatpush1.bf16.msra.mxu0 %v478
      %489 = vmatprep.subr.bf16.mxu0 0
      %490 = vmatpush1.bf16.msra.mxu0 %v477
      %491 = vmatprep.subr.bf16.mxu0 0
      %492 = vmatpush1.bf16.msra.mxu0 %v476
      %493 = vmatprep.subr.bf16.mxu0 0
      %494 = vmatpush1.bf16.msra.mxu0 %v475
      %495 = vmatprep.subr.bf16.mxu0 0
      %496 = vmatpush1.bf16.msra.mxu0 %v474
      %497 = vmatprep.subr.bf16.mxu0 0
      %498 = vmatpush1.bf16.msra.mxu0 %v473
      %499 = vmatprep.subr.bf16.mxu0 0
      %500 = vmatpush1.bf16.msra.mxu0 %v472
      %501 = vmatprep.subr.bf16.mxu0 0
      %502 = vmatpush1.bf16.msra.mxu0 %v471
      %503 = vmatprep.subr.bf16.mxu0 0
      %504 = vmatpush2.bf16.msra.mxu0 0
      %505 = vmatprep.subr.bf16.mxu0 0
      %506 = vmatpush2.bf16.msra.mxu0 0
      %507 = vmatprep.subr.bf16.mxu0 0
      %508 = vmatpush2.bf16.msra.mxu0 0
      %509 = vmatprep.subr.bf16.mxu0 0
      %510 = vmatpush2.bf16.msra.mxu0 0
      %511 = vmatprep.subr.bf16.mxu0 0
      %512 = vmatpush2.bf16.msra.mxu0 0
      %513 = vmatprep.subr.bf16.mxu0 0
      %514 = vmatpush2.bf16.msra.mxu0 0
      %515 = vmatprep.subr.bf16.mxu0 0
      %516 = vmatpush2.bf16.msra.mxu0 0
      %517 = vmatprep.subr.bf16.mxu0 0
      %518 = vmatpush2.bf16.msra.mxu0 0
      %519 = vmatprep.mubr.bf16.mxu0 0
      %520 = vmatmul.mubr.bf16.gmra.mxu0 %v421
      %v521 = vpop.f32.mrf.mxu0
      %v522 = vadd.f32 0.0, %v521
      %v523 = vpop.f32.mrf.mxu0
      %v524 = vpop.f32.mrf.mxu0
      %v525 = vadd.f32 0.0, %v524
      %v526 = vpop.f32.mrf.mxu0
      %527 = vmatprep.mubr.bf16.mxu0 0
      %528 = vmatmul.mubr.bf16.gmra.mxu0 %v422
      %v529 = vpop.f32.mrf.mxu0
      %v530 = vadd.f32 0.0, %v529
      %v531 = vpop.f32.mrf.mxu0
      %v532 = vpop.f32.mrf.mxu0
      %v533 = vpop.f32.mrf.mxu0
      %534 = vdwg.mxu0
      %v535 = vpack.c.bf16 %v525, %v522
      %v536 = vpack.c.bf16 %v530, %v530
      %v539 = vunpack.c.l.b16 %v535
      %v540 = vunpack.c.h.b16 %v535
      %v541 = vunpack.c.l.b16 %v536
      %v542 = vpack.c.b16 %v539, %v539
      %v543 = vpack.c.b16 %v540, %v540
      %v544 = vpack.c.b16 %v541, %v541
      %548 = vst [vmem:[#allocation2 + $0x8] sm:$0xf] %v542
      %549 = vst [vmem:[#allocation2 + $0x18] sm:$0xf] %v543
      %550 = vst [vmem:[#allocation2 + $0x28] sm:$0xf] %v544
      %v551 = vld [vmem:[%s0] sm:$0xff]
      %v552 = vld [vmem:[%s0 + $0x8] sm:$0xff]
      %v553 = vld [vmem:[%s0 + $0x10] sm:$0xff]
      %554 = vset.pattern.permute.xlu0 6
      %555 = vperm.xlu0 %554, %v551
      %v556 = vpop.permute.xlu0 %555
      %557 = vset.pattern.permute.xlu0 6
      %558 = vperm.xlu0 %557, %v552
      %v559 = vpop.permute.xlu0 %558
      %560 = vset.pattern.permute.xlu0 6
      %561 = vperm.xlu0 %560, %v553
      %v562 = vpop.permute.xlu0 %561
      %vm563 = vcmp.eq.s32.totalorder %v52, %v556
      %vm564 = vcmp.eq.s32.totalorder %v52, %v559
      %vm565 = vcmp.eq.s32.totalorder %v52, %v562
      %566 = vset.pattern.permute.xlu0 7
      %567 = vperm.xlu0 %566, %v551
      %v568 = vpop.permute.xlu0 %567
      %569 = vset.pattern.permute.xlu0 7
      %570 = vperm.xlu0 %569, %v552
      %v571 = vpop.permute.xlu0 %570
      %572 = vset.pattern.permute.xlu0 7
      %573 = vperm.xlu0 %572, %v553
      %v574 = vpop.permute.xlu0 %573
      %vm575 = vcmp.eq.s32.totalorder %v52, %v568
      %vm576 = vcmp.eq.s32.totalorder %v52, %v571
      %vm577 = vcmp.eq.s32.totalorder %v52, %v574
      %vm578 = vmor %vm563, %vm575
      %vm579 = vmor %vm564, %vm576
      %vm580 = vmor %vm565, %vm577
      %v581 = vsel %vm578, 1, 0
      %v582 = vsel %vm579, 1, 0
      %v583 = vsel %vm580, 1, 0
      %v584 = vcvt.s32.f32 %v581
      %v585 = vcvt.s32.f32 %v582
      %v586 = vcvt.s32.f32 %v583
      %v587 = vpack.c.bf16 %v585, %v584
      %v588 = vpack.c.bf16 %v586, %v586
      %v589 = vld [vmem:[#allocation3] sm:$0xf]
      %v590 = vld [vmem:[#allocation3 + $0x4] sm:$0xf]
      %v591 = vld [vmem:[#allocation3 + $0x8] sm:$0xf]
      %v592 = vld [vmem:[#allocation3 + $0xc] sm:$0xf]
      %v593 = vld [vmem:[#allocation3 + $0x10] sm:$0xf]
      %v594 = vld [vmem:[#allocation3 + $0x14] sm:$0xf]
      %v595 = vld [vmem:[#allocation3 + $0x18] sm:$0xf]
      %v596 = vld [vmem:[#allocation3 + $0x1c] sm:$0xf]
      %v597 = vld [vmem:[#allocation3 + $0x20] sm:$0xf]
      %v598 = vld [vmem:[#allocation3 + $0x24] sm:$0xf]
      %v599 = vld [vmem:[#allocation3 + $0x28] sm:$0xf]
      %v600 = vld [vmem:[#allocation3 + $0x2c] sm:$0xf]
      %v601 = vld [vmem:[#allocation3 + $0x30] sm:$0xf]
      %v602 = vld [vmem:[#allocation3 + $0x34] sm:$0xf]
      %v603 = vld [vmem:[#allocation3 + $0x38] sm:$0xf]
      %v604 = vld [vmem:[#allocation3 + $0x3c] sm:$0xf]
      %v621 = vunpack.c.l.b16 %v589
      %v622 = vunpack.c.l.b16 %v590
      %v623 = vunpack.c.l.b16 %v591
      %v624 = vunpack.c.l.b16 %v592
      %v625 = vunpack.c.l.b16 %v593
      %v626 = vunpack.c.l.b16 %v594
      %v627 = vunpack.c.l.b16 %v595
      %v628 = vunpack.c.l.b16 %v596
      %v629 = vunpack.c.l.b16 %v597
      %v630 = vunpack.c.l.b16 %v598
      %v631 = vunpack.c.l.b16 %v599
      %v632 = vunpack.c.l.b16 %v600
      %v633 = vunpack.c.l.b16 %v601
      %v634 = vunpack.c.l.b16 %v602
      %v635 = vunpack.c.l.b16 %v603
      %v636 = vunpack.c.l.b16 %v604
      %v637 = vpack.c.b16 %v622, %v621
      %v638 = vpack.c.b16 %v624, %v623
      %v639 = vpack.c.b16 %v626, %v625
      %v640 = vpack.c.b16 %v628, %v627
      %v641 = vpack.c.b16 %v630, %v629
      %v642 = vpack.c.b16 %v632, %v631
      %v643 = vpack.c.b16 %v634, %v633
      %v644 = vpack.c.b16 %v636, %v635
      %653 = vmatprep.subr.bf16.mxu0 0
      %654 = vmatpush1.bf16.msra.mxu0 %v644
      %655 = vmatprep.subr.bf16.mxu0 0
      %656 = vmatpush1.bf16.msra.mxu0 %v643
      %657 = vmatprep.subr.bf16.mxu0 0
      %658 = vmatpush1.bf16.msra.mxu0 %v642
      %659 = vmatprep.subr.bf16.mxu0 0
      %660 = vmatpush1.bf16.msra.mxu0 %v641
      %661 = vmatprep.subr.bf16.mxu0 0
      %662 = vmatpush1.bf16.msra.mxu0 %v640
      %663 = vmatprep.subr.bf16.mxu0 0
      %664 = vmatpush1.bf16.msra.mxu0 %v639
      %665 = vmatprep.subr.bf16.mxu0 0
      %666 = vmatpush1.bf16.msra.mxu0 %v638
      %667 = vmatprep.subr.bf16.mxu0 0
      %668 = vmatpush1.bf16.msra.mxu0 %v637
      %669 = vmatprep.subr.bf16.mxu0 0
      %670 = vmatpush2.bf16.msra.mxu0 0
      %671 = vmatprep.subr.bf16.mxu0 0
      %672 = vmatpush2.bf16.msra.mxu0 0
      %673 = vmatprep.subr.bf16.mxu0 0
      %674 = vmatpush2.bf16.msra.mxu0 0
      %675 = vmatprep.subr.bf16.mxu0 0
      %676 = vmatpush2.bf16.msra.mxu0 0
      %677 = vmatprep.subr.bf16.mxu0 0
      %678 = vmatpush2.bf16.msra.mxu0 0
      %679 = vmatprep.subr.bf16.mxu0 0
      %680 = vmatpush2.bf16.msra.mxu0 0
      %681 = vmatprep.subr.bf16.mxu0 0
      %682 = vmatpush2.bf16.msra.mxu0 0
      %683 = vmatprep.subr.bf16.mxu0 0
      %684 = vmatpush2.bf16.msra.mxu0 0
      %685 = vmatprep.mubr.bf16.mxu0 0
      %686 = vmatmul.mubr.bf16.gmra.mxu0 %v587
      %v687 = vpop.f32.mrf.mxu0
      %v688 = vadd.f32 0.0, %v687
      %v689 = vpop.f32.mrf.mxu0
      %v690 = vpop.f32.mrf.mxu0
      %v691 = vadd.f32 0.0, %v690
      %v692 = vpop.f32.mrf.mxu0
      %693 = vmatprep.mubr.bf16.mxu0 0
      %694 = vmatmul.mubr.bf16.gmra.mxu0 %v588
      %v695 = vpop.f32.mrf.mxu0
      %v696 = vadd.f32 0.0, %v695
      %v697 = vpop.f32.mrf.mxu0
      %v698 = vpop.f32.mrf.mxu0
      %v699 = vpop.f32.mrf.mxu0
      %700 = vdwg.mxu0
      %v701 = vpack.c.bf16 %v691, %v688
      %v702 = vpack.c.bf16 %v696, %v696
      %v705 = vunpack.c.l.b16 %v701
      %v706 = vunpack.c.h.b16 %v701
      %v707 = vunpack.c.l.b16 %v702
      %v708 = vpack.c.b16 %v705, %v705
      %v709 = vpack.c.b16 %v706, %v706
      %v710 = vpack.c.b16 %v707, %v707
      %714 = vst [vmem:[#allocation2 + $0xc] sm:$0xf] %v708
      %715 = vst [vmem:[#allocation2 + $0x1c] sm:$0xf] %v709
      %716 = vst [vmem:[#allocation2 + $0x2c] sm:$0xf] %v710
    $region29: #{tpu_custom_call.1} parent=1 // pred_fallthru
      _
    %v717 = vld [vmem:[#allocation2] sm:$0xff]
    %v718 = vld [vmem:[#allocation2 + $0x8] sm:$0xff]
    %v719 = vld [vmem:[#allocation2 + $0x10] sm:$0xff]
    %v720 = vld [vmem:[#allocation2 + $0x18] sm:$0xff]
    %v721 = vld [vmem:[#allocation2 + $0x20] sm:$0xff]
    %v722 = vld [vmem:[#allocation2 + $0x28] sm:$0xff]
    %v723 = vld [vmem:[#allocation6] sm:$0xf]
    %v724 = vld [vmem:[#allocation6 + $0x4] sm:$0xf]
    %v725 = vld [vmem:[#allocation6 + $0x8] sm:$0xf]
    %v726 = vld [vmem:[#allocation6 + $0xc] sm:$0xf]
    %v727 = vld [vmem:[#allocation6 + $0x10] sm:$0xf]
    %v728 = vld [vmem:[#allocation6 + $0x14] sm:$0xf]
    %v729 = vld [vmem:[#allocation6 + $0x18] sm:$0xf]
    %v730 = vld [vmem:[#allocation6 + $0x1c] sm:$0xf]
    %v731 = vld [vmem:[#allocation6 + $0x20] sm:$0xf]
    %v732 = vld [vmem:[#allocation6 + $0x24] sm:$0xf]
    %v733 = vld [vmem:[#allocation6 + $0x28] sm:$0xf]
    %v734 = vld [vmem:[#allocation6 + $0x2c] sm:$0xf]
    %v735 = vld [vmem:[#allocation6 + $0x30] sm:$0xf]
    %v736 = vld [vmem:[#allocation6 + $0x34] sm:$0xf]
    %v737 = vld [vmem:[#allocation6 + $0x38] sm:$0xf]
    %v738 = vld [vmem:[#allocation6 + $0x3c] sm:$0xf]
    %v739 = vld [vmem:[#allocation6 + $0x40] sm:$0xf]
    %v740 = vld [vmem:[#allocation6 + $0x44] sm:$0xf]
    %v741 = vld [vmem:[#allocation6 + $0x48] sm:$0xf]
    %v742 = vld [vmem:[#allocation6 + $0x4c] sm:$0xf]
    %v743 = vld [vmem:[#allocation6 + $0x50] sm:$0xf]
    %v744 = vld [vmem:[#allocation6 + $0x54] sm:$0xf]
    %v745 = vld [vmem:[#allocation6 + $0x58] sm:$0xf]
    %v746 = vld [vmem:[#allocation6 + $0x5c] sm:$0xf]
    %v747 = vld [vmem:[#allocation6 + $0x60] sm:$0xf]
    %v748 = vld [vmem:[#allocation6 + $0x64] sm:$0xf]
    %v749 = vld [vmem:[#allocation6 + $0x68] sm:$0xf]
    %v750 = vld [vmem:[#allocation6 + $0x6c] sm:$0xf]
    %v751 = vld [vmem:[#allocation6 + $0x70] sm:$0xf]
    %v752 = vld [vmem:[#allocation6 + $0x74] sm:$0xf]
    %v753 = vld [vmem:[#allocation6 + $0x78] sm:$0xf]
    %v754 = vld [vmem:[#allocation6 + $0x7c] sm:$0xf]
    %v755 = vld [vmem:[#allocation6 + $0x80] sm:$0xf]
    %v756 = vld [vmem:[#allocation6 + $0x84] sm:$0xf]
    %v757 = vld [vmem:[#allocation6 + $0x88] sm:$0xf]
    %v758 = vld [vmem:[#allocation6 + $0x8c] sm:$0xf]
    %v759 = vld [vmem:[#allocation6 + $0x90] sm:$0xf]
    %v760 = vld [vmem:[#allocation6 + $0x94] sm:$0xf]
    %v761 = vld [vmem:[#allocation6 + $0x98] sm:$0xf]
    %v762 = vld [vmem:[#allocation6 + $0x9c] sm:$0xf]
    %v763 = vld [vmem:[#allocation6 + $0xa0] sm:$0xf]
    %v764 = vld [vmem:[#allocation6 + $0xa4] sm:$0xf]
    %v765 = vld [vmem:[#allocation6 + $0xa8] sm:$0xf]
    %v766 = vld [vmem:[#allocation6 + $0xac] sm:$0xf]
    %v767 = vld [vmem:[#allocation6 + $0xb0] sm:$0xf]
    %v768 = vld [vmem:[#allocation6 + $0xb4] sm:$0xf]
    %v769 = vld [vmem:[#allocation6 + $0xb8] sm:$0xf]
    %v770 = vld [vmem:[#allocation6 + $0xbc] sm:$0xf]
    %v771 = vld [vmem:[#allocation6 + $0xc0] sm:$0xf]
    %v772 = vld [vmem:[#allocation6 + $0xc4] sm:$0xf]
    %v773 = vld [vmem:[#allocation6 + $0xc8] sm:$0xf]
    %v774 = vld [vmem:[#allocation6 + $0xcc] sm:$0xf]
    %v775 = vld [vmem:[#allocation6 + $0xd0] sm:$0xf]
    %v776 = vld [vmem:[#allocation6 + $0xd4] sm:$0xf]
    %v777 = vld [vmem:[#allocation6 + $0xd8] sm:$0xf]
    %v778 = vld [vmem:[#allocation6 + $0xdc] sm:$0xf]
    %v779 = vld [vmem:[#allocation6 + $0xe0] sm:$0xf]
    %v780 = vld [vmem:[#allocation6 + $0xe4] sm:$0xf]
    %v781 = vld [vmem:[#allocation6 + $0xe8] sm:$0xf]
    %v782 = vld [vmem:[#allocation6 + $0xec] sm:$0xf]
    %v783 = vld [vmem:[#allocation6 + $0xf0] sm:$0xf]
    %v784 = vld [vmem:[#allocation6 + $0xf4] sm:$0xf]
    %v785 = vld [vmem:[#allocation6 + $0xf8] sm:$0xf]
    %v786 = vld [vmem:[#allocation6 + $0xfc] sm:$0xf]
    %v787 = vld [vmem:[%s3] sm:$0x1]
    %v789 = vlaneseq
    %v790 = vshrl.u32 %v789, 7
    %v791 = vsub.s32 0, %v790
    %v792 = vrot.slane %v787, %v791
    %v800 = vunpack.c.l.b16 %v717
    %v801 = vunpack.c.h.b16 %v717
    %v802 = vunpack.c.l.b16 %v718
    %v803 = vunpack.c.h.b16 %v718
    %v804 = vunpack.c.l.b16 %v719
    %v805 = vunpack.c.h.b16 %v719
    %v806 = vunpack.c.l.b16 %v720
    %v807 = vunpack.c.h.b16 %v720
    %v808 = vunpack.c.l.b16 %v721
    %v809 = vunpack.c.h.b16 %v721
    %v810 = vunpack.c.l.b16 %v722
    %v811 = vunpack.c.h.b16 %v722
    %v812 = vpack.c.b16 %v804, %v800
    %v813 = vpack.c.b16 %v805, %v801
    %v814 = vpack.c.b16 %v806, %v802
    %v815 = vpack.c.b16 %v807, %v803
    %v816 = vpack.c.b16 %v808, %v808
    %v817 = vpack.c.b16 %v809, %v809
    %v818 = vpack.c.b16 %v810, %v810
    %v819 = vpack.c.b16 %v811, %v811
    %v892 = vunpack.c.l.b16 %v723
    %v893 = vunpack.c.l.b16 %v724
    %v894 = vunpack.c.l.b16 %v725
    %v895 = vunpack.c.l.b16 %v726
    %v896 = vunpack.c.l.b16 %v727
    %v897 = vunpack.c.l.b16 %v728
    %v898 = vunpack.c.l.b16 %v729
    %v899 = vunpack.c.l.b16 %v730
    %v900 = vunpack.c.l.b16 %v731
    %v901 = vunpack.c.l.b16 %v732
    %v902 = vunpack.c.l.b16 %v733
    %v903 = vunpack.c.l.b16 %v734
    %v904 = vunpack.c.l.b16 %v735
    %v905 = vunpack.c.l.b16 %v736
    %v906 = vunpack.c.l.b16 %v737
    %v907 = vunpack.c.l.b16 %v738
    %v908 = vunpack.c.l.b16 %v739
    %v909 = vunpack.c.l.b16 %v740
    %v910 = vunpack.c.l.b16 %v741
    %v911 = vunpack.c.l.b16 %v742
    %v912 = vunpack.c.l.b16 %v743
    %v913 = vunpack.c.l.b16 %v744
    %v914 = vunpack.c.l.b16 %v745
    %v915 = vunpack.c.l.b16 %v746
    %v916 = vunpack.c.l.b16 %v747
    %v917 = vunpack.c.l.b16 %v748
    %v918 = vunpack.c.l.b16 %v749
    %v919 = vunpack.c.l.b16 %v750
    %v920 = vunpack.c.l.b16 %v751
    %v921 = vunpack.c.l.b16 %v752
    %v922 = vunpack.c.l.b16 %v753
    %v923 = vunpack.c.l.b16 %v754
    %v924 = vunpack.c.l.b16 %v755
    %v925 = vunpack.c.l.b16 %v756
    %v926 = vunpack.c.l.b16 %v757
    %v927 = vunpack.c.l.b16 %v758
    %v928 = vunpack.c.l.b16 %v759
    %v929 = vunpack.c.l.b16 %v760
    %v930 = vunpack.c.l.b16 %v761
    %v931 = vunpack.c.l.b16 %v762
    %v932 = vunpack.c.l.b16 %v763
    %v933 = vunpack.c.l.b16 %v764
    %v934 = vunpack.c.l.b16 %v765
    %v935 = vunpack.c.l.b16 %v766
    %v936 = vunpack.c.l.b16 %v767
    %v937 = vunpack.c.l.b16 %v768
    %v938 = vunpack.c.l.b16 %v769
    %v939 = vunpack.c.l.b16 %v770
    %v940 = vunpack.c.l.b16 %v771
    %v941 = vunpack.c.l.b16 %v772
    %v942 = vunpack.c.l.b16 %v773
    %v943 = vunpack.c.l.b16 %v774
    %v944 = vunpack.c.l.b16 %v775
    %v945 = vunpack.c.l.b16 %v776
    %v946 = vunpack.c.l.b16 %v777
    %v947 = vunpack.c.l.b16 %v778
    %v948 = vunpack.c.l.b16 %v779
    %v949 = vunpack.c.l.b16 %v780
    %v950 = vunpack.c.l.b16 %v781
    %v951 = vunpack.c.l.b16 %v782
    %v952 = vunpack.c.l.b16 %v783
    %v953 = vunpack.c.l.b16 %v784
    %v954 = vunpack.c.l.b16 %v785
    %v955 = vunpack.c.l.b16 %v786
    %v956 = vpack.c.b16 %v893, %v892
    %v957 = vpack.c.b16 %v895, %v894
    %v958 = vpack.c.b16 %v897, %v896
    %v959 = vpack.c.b16 %v899, %v898
    %v960 = vpack.c.b16 %v901, %v900
    %v961 = vpack.c.b16 %v903, %v902
    %v962 = vpack.c.b16 %v905, %v904
    %v963 = vpack.c.b16 %v907, %v906
    %v964 = vpack.c.b16 %v909, %v908
    %v965 = vpack.c.b16 %v911, %v910
    %v966 = vpack.c.b16 %v913, %v912
    %v967 = vpack.c.b16 %v915, %v914
    %v968 = vpack.c.b16 %v917, %v916
    %v969 = vpack.c.b16 %v919, %v918
    %v970 = vpack.c.b16 %v921, %v920
    %v971 = vpack.c.b16 %v923, %v922
    %v972 = vpack.c.b16 %v925, %v924
    %v973 = vpack.c.b16 %v927, %v926
    %v974 = vpack.c.b16 %v929, %v928
    %v975 = vpack.c.b16 %v931, %v930
    %v976 = vpack.c.b16 %v933, %v932
    %v977 = vpack.c.b16 %v935, %v934
    %v978 = vpack.c.b16 %v937, %v936
    %v979 = vpack.c.b16 %v939, %v938
    %v980 = vpack.c.b16 %v941, %v940
    %v981 = vpack.c.b16 %v943, %v942
    %v982 = vpack.c.b16 %v945, %v944
    %v983 = vpack.c.b16 %v947, %v946
    %v984 = vpack.c.b16 %v949, %v948
    %v985 = vpack.c.b16 %v951, %v950
    %v986 = vpack.c.b16 %v953, %v952
    %v987 = vpack.c.b16 %v955, %v954
    %1020 = vmatprep.subr.bf16.mxu0 0
    %1021 = vmatpush1.bf16.msra.mxu0 %v963
    %1022 = vmatprep.subr.bf16.mxu0 0
    %1023 = vmatpush1.bf16.msra.mxu0 %v962
    %1024 = vmatprep.subr.bf16.mxu0 0
    %1025 = vmatpush1.bf16.msra.mxu0 %v961
    %1026 = vmatprep.subr.bf16.mxu0 0
    %1027 = vmatpush1.bf16.msra.mxu0 %v960
    %1028 = vmatprep.subr.bf16.mxu0 0
    %1029 = vmatpush1.bf16.msra.mxu0 %v959
    %1030 = vmatprep.subr.bf16.mxu0 0
    %1031 = vmatpush1.bf16.msra.mxu0 %v958
    %1032 = vmatprep.subr.bf16.mxu0 0
    %1033 = vmatpush1.bf16.msra.mxu0 %v957
    %1034 = vmatprep.subr.bf16.mxu0 0
    %1035 = vmatpush1.bf16.msra.mxu0 %v956
    %1036 = vmatprep.subr.bf16.mxu0 0
    %1037 = vmatpush2.bf16.msra.mxu0 %v971
    %1038 = vmatprep.subr.bf16.mxu0 0
    %1039 = vmatpush2.bf16.msra.mxu0 %v970
    %1040 = vmatprep.subr.bf16.mxu0 0
    %1041 = vmatpush2.bf16.msra.mxu0 %v969
    %1042 = vmatprep.subr.bf16.mxu0 0
    %1043 = vmatpush2.bf16.msra.mxu0 %v968
    %1044 = vmatprep.subr.bf16.mxu0 0
    %1045 = vmatpush2.bf16.msra.mxu0 %v967
    %1046 = vmatprep.subr.bf16.mxu0 0
    %1047 = vmatpush2.bf16.msra.mxu0 %v966
    %1048 = vmatprep.subr.bf16.mxu0 0
    %1049 = vmatpush2.bf16.msra.mxu0 %v965
    %1050 = vmatprep.subr.bf16.mxu0 0
    %1051 = vmatpush2.bf16.msra.mxu0 %v964
    %1052 = vmatprep.mubr.bf16.mxu0 %v813
    %1053 = vmatmul.mubr.bf16.gmra.mxu0 %v812
    %v1054 = vpop.f32.mrf.mxu0
    %v1055 = vadd.f32 %v792, %v1054
    %v1056 = vpop.f32.mrf.mxu0
    %v1057 = vpop.f32.mrf.mxu0
    %v1058 = vadd.f32 %v792, %v1057
    %v1059 = vpop.f32.mrf.mxu0
    %1060 = vmatprep.mubr.bf16.mxu0 %v817
    %1061 = vmatmul.mubr.bf16.gmra.mxu0 %v816
    %v1062 = vpop.f32.mrf.mxu0
    %v1063 = vadd.f32 %v792, %v1062
    %v1064 = vpop.f32.mrf.mxu0
    %v1065 = vpop.f32.mrf.mxu0
    %v1066 = vpop.f32.mrf.mxu0
    %1067 = vdwg.mxu0
    %1068 = vmatprep.subr.bf16.mxu0 0
    %1069 = vmatpush1.bf16.msra.mxu0 %v979
    %1070 = vmatprep.subr.bf16.mxu0 0
    %1071 = vmatpush1.bf16.msra.mxu0 %v978
    %1072 = vmatprep.subr.bf16.mxu0 0
    %1073 = vmatpush1.bf16.msra.mxu0 %v977
    %1074 = vmatprep.subr.bf16.mxu0 0
    %1075 = vmatpush1.bf16.msra.mxu0 %v976
    %1076 = vmatprep.subr.bf16.mxu0 0
    %1077 = vmatpush1.bf16.msra.mxu0 %v975
    %1078 = vmatprep.subr.bf16.mxu0 0
    %1079 = vmatpush1.bf16.msra.mxu0 %v974
    %1080 = vmatprep.subr.bf16.mxu0 0
    %1081 = vmatpush1.bf16.msra.mxu0 %v973
    %1082 = vmatprep.subr.bf16.mxu0 0
    %1083 = vmatpush1.bf16.msra.mxu0 %v972
    %1084 = vmatprep.subr.bf16.mxu0 0
    %1085 = vmatpush2.bf16.msra.mxu0 %v987
    %1086 = vmatprep.subr.bf16.mxu0 0
    %1087 = vmatpush2.bf16.msra.mxu0 %v986
    %1088 = vmatprep.subr.bf16.mxu0 0
    %1089 = vmatpush2.bf16.msra.mxu0 %v985
    %1090 = vmatprep.subr.bf16.mxu0 0
    %1091 = vmatpush2.bf16.msra.mxu0 %v984
    %1092 = vmatprep.subr.bf16.mxu0 0
    %1093 = vmatpush2.bf16.msra.mxu0 %v983
    %1094 = vmatprep.subr.bf16.mxu0 0
    %1095 = vmatpush2.bf16.msra.mxu0 %v982
    %1096 = vmatprep.subr.bf16.mxu0 0
    %1097 = vmatpush2.bf16.msra.mxu0 %v981
    %1098 = vmatprep.subr.bf16.mxu0 0
    %1099 = vmatpush2.bf16.msra.mxu0 %v980
    %1100 = vmatprep.mubr.bf16.mxu0 %v815
    %1101 = vmatmul.mubr.bf16.gmra.mxu0 %v814
    %v1102 = vpop.f32.mrf.mxu0
    %v1103 = vadd.f32 %v1055, %v1102
    %v1104 = vpop.f32.mrf.mxu0
    %v1105 = vpop.f32.mrf.mxu0
    %v1106 = vadd.f32 %v1058, %v1105
    %v1107 = vpop.f32.mrf.mxu0
    %1108 = vmatprep.mubr.bf16.mxu0 %v819
    %1109 = vmatmul.mubr.bf16.gmra.mxu0 %v818
    %v1110 = vpop.f32.mrf.mxu0
    %v1111 = vadd.f32 %v1063, %v1110
    %v1112 = vpop.f32.mrf.mxu0
    %v1113 = vpop.f32.mrf.mxu0
    %v1114 = vpop.f32.mrf.mxu0
    %1115 = vdwg.mxu0
    %1116 = vst [vmem:[#allocation8] sm:$0xff] %v1103
    %1117 = vst [vmem:[#allocation8 + $0x8] sm:$0xff] %v1106
    %1118 = vst [vmem:[#allocation8 + $0x10] sm:$0xff] %v1111
    // Predicated region
    $region30: #{tpu_custom_call.1} parent=1 // pred_check
      _
    $region31: #{tpu_custom_call.1} parent=1 // pred_check_branch
      %1120 = sbr.rel (0) target = $region33
    $region32: #{tpu_custom_call.1} parent=1 // pred_region
      %s1122 = ssub.s32 384, 384
      %1123 = vsyncadd [#allocation5], %s1122
      %s1124 = sshll.u32 [#allocation8], 4
      %s1125 = int_to_ptr.vmem [resolvable:$true] %s1124
      %1130 = dma.vmem_to_hbm [thread:$0]  %s1125, 384, %s4, [#allocation5], 128, 128, 8
    $region33: #{tpu_custom_call.1} parent=1 // pred_fallthru
      _
    // Predicated region
    $region34: #{tpu_custom_call.1} parent=1 // pred_check
      _
    $region35: #{tpu_custom_call.1} parent=1 // pred_check_branch
      %1132 = sbr.rel (0) target = $region37
    $region36: #{tpu_custom_call.1} parent=1 // pred_region
      %1133 = dma.done [#allocation5], 384
    $region37: #{tpu_custom_call.1} parent=1 // pred_fallthru
      _
    %1134 = vsyncpa [#allocation4], 1
    %1135 = vsyncpa [#allocation7], 1
    %1136 = vsyncpa [#allocation5], 1

</llo_original>
